<compile_context>
chip_gen: v7x
topology: tpu7x:2x2x1
jax: 0.10.0
libtpu: 0.0.40
codegen_flags: <defaults>
</compile_context>

<pallas_src>
import math
import functools

import jax
import jax.numpy as jnp
from jax.experimental import pallas as pl
from jax.experimental.pallas import tpu as pltpu


# ----------------------------------------------------------------------------
# Kernels (pure elementwise, HBM-bandwidth bound; MXU/EUP intentionally idle)
# ----------------------------------------------------------------------------
def _add_pe_kernel(x_ref, pe_ref, o_ref):
    # x_ref: (TB, TL)   pe_ref: (1, TL)   o_ref: (TB, TL)
    # (1, TL) broadcasts against (TB, TL) on the VPU; single cast at the store.
    o_ref[...] = (x_ref[...] + pe_ref[...]).astype(o_ref.dtype)


def _add_pe_dropout_kernel(x_ref, pe_ref, m_ref, o_ref, *, scale):
    # Inverted dropout: keep iff mask != 0, scale kept values by 1/(1-p).
    # The int8 keep-mask comes from the wrapper (jax.random), so the dropout
    # pattern does not depend on the tile size or chip generation.
    y = x_ref[...] + pe_ref[...]
    keep = m_ref[...] != 0
    o_ref[...] = jnp.where(
        keep, y * jnp.asarray(scale, y.dtype), jnp.zeros_like(y)
    ).astype(o_ref.dtype)


# ----------------------------------------------------------------------------
# Sinusoidal table (same math as the torch __init__).
# ----------------------------------------------------------------------------
def make_positional_table(max_len, d_model, dtype=jnp.float32):
    position = jnp.arange(max_len, dtype=jnp.float32)[:, None]            # (L, 1)
    div_term = jnp.exp(
        jnp.arange(0, d_model, 2, dtype=jnp.float32) * -(math.log(10000.0) / d_model)
    )                                                                     # (D/2,)
    angles = position * div_term                                          # (L, D/2)
    pe = jnp.zeros((max_len, d_model), dtype)
    pe = pe.at[:, 0::2].set(jnp.sin(angles).astype(dtype))
    pe = pe.at[:, 1::2].set(jnp.cos(angles).astype(dtype))
    return pe


# ----------------------------------------------------------------------------
# Tiling helpers
# ----------------------------------------------------------------------------
def _device_budgets():
    """Return (vmem_budget_bytes, per_tile_target_bytes), generation aware."""
    try:
        vmem_cap = int(pltpu.get_tpu_info().vmem_capacity_bytes)
    except Exception:  # interpret mode / non-TPU backend during tracing
        vmem_cap = 64 << 20
    if vmem_cap > (64 << 20):          # v5e / v6e: 128 MiB physical VMEM
        return 96 << 20, 16 << 20
    return 56 << 20, 8 << 20           # v7x-class: 64 MiB physical VMEM


def _vmem_need(tb, tl, x_bytes, pe_bytes, mask_bytes):
    # Double-buffered x tile + out tile (+ mask tile) + pe block, plus slack.
    per_step = tb * tl * (2 * x_bytes + mask_bytes) + tl * pe_bytes
    return 2 * per_step + (2 << 20)


def _choose_tiles(B, L, x_bytes, pe_bytes, mask_bytes, target_bytes, vmem_budget):
    lane = 128
    pack = max(8, 32 // x_bytes)       # sublane packing: 8 f32, 16 bf16, 32 int8

    # Column (lane) tile: keep full L unless that alone blows the VMEM budget.
    # Only tile columns when L is a multiple of 128 (the (8,128) rule).
    TL = L
    if L % lane == 0:
        while TL > lane and _vmem_need(min(B, pack), TL, x_bytes, pe_bytes,
                                       mask_bytes) > vmem_budget:
            TL = max(lane, (TL // 2) // lane * lane)

    # Row (batch) tile: ~target_bytes of x per grid step, on pack boundaries.
    row_bytes = TL * x_bytes
    if B <= pack or B * row_bytes <= target_bytes:
        TB = B
    else:
        TB = min(B, max(pack, (target_bytes // row_bytes) // pack * pack))

    # Shrink rows if the double-buffered pipeline still exceeds the budget
    # (instead of silently clamping vmem_limit below what the blocks need).
    while TB > pack and _vmem_need(TB, TL, x_bytes, pe_bytes, mask_bytes) > vmem_budget:
        TB = max(pack, (TB // 2) // pack * pack)

    # Megacore (v7x has 2 TensorCores): give the parallel grid >= 2 steps
    # whenever the batch is large enough to split on pack boundaries.
    if pl.cdiv(B, TB) * pl.cdiv(L, TL) < 2 and B >= 2 * pack:
        TB = max(pack, (B // 2) // pack * pack)

    return TB, TL


# ----------------------------------------------------------------------------
# Wrapper
# ----------------------------------------------------------------------------
@functools.partial(jax.jit, static_argnames=("p",))
def positional_encoding(x, pe_table, seed=0, p=0.0):
    """out = dropout(x + pe[:S]);  x: (B, S, D), pe_table: (max_len, D)."""
    B, S, D = x.shape
    L = S * D

    if p >= 1.0:                       # nn.Dropout(p=1): everything dropped
        return jnp.zeros_like(x)

    # Lane-dense 2D view: last dim S*D (typically a multiple of 128) gives
    # full-width unmasked vector stores, and pe streams contiguously.
    x2 = x.reshape(B, L)
    pe_flat = pe_table[:S].astype(x.dtype).reshape(1, L)   # pe kept in x.dtype

    x_bytes = jnp.dtype(x.dtype).itemsize
    pe_bytes = x_bytes
    mask_bytes = 1 if p > 0.0 else 0

    vmem_budget, target_bytes = _device_budgets()
    TB, TL = _choose_tiles(B, L, x_bytes, pe_bytes, mask_bytes,
                           target_bytes, vmem_budget)
    grid = (pl.cdiv(B, TB), pl.cdiv(L, TL))

    need = _vmem_need(TB, TL, x_bytes, pe_bytes, mask_bytes)
    cparams = pltpu.CompilerParams(
        dimension_semantics=("parallel", "parallel"),
        vmem_limit_bytes=int(min(max(32 << 20, need), vmem_budget)),
    )
    out_shape = jax.ShapeDtypeStruct((B, L), x.dtype)

    x_spec = pl.BlockSpec((TB, TL), lambda i, j: (i, j))
    pe_spec = pl.BlockSpec((1, TL), lambda i, j: (0, j))   # resident when grid[1]==1
    out_spec = pl.BlockSpec((TB, TL), lambda i, j: (i, j))

    if p == 0.0:
        out2 = pl.pallas_call(
            _add_pe_kernel,
            out_shape=out_shape,
            grid_spec=pl.GridSpec(grid=grid,
                                  in_specs=[x_spec, pe_spec],
                                  out_specs=out_spec),
            compiler_params=cparams,
        )(x2, pe_flat)
    else:
        # Mask generated once outside the kernel: tiling-independent, identical
        # across generations, and portable to interpret mode (no pltpu.prng_*).
        keep = jax.random.bernoulli(jax.random.PRNGKey(seed), p=1.0 - p, shape=(B, L))
        mask = keep.astype(jnp.int8)
        m_spec = pl.BlockSpec((TB, TL), lambda i, j: (i, j))
        out2 = pl.pallas_call(
            functools.partial(_add_pe_dropout_kernel, scale=1.0 / (1.0 - p)),
            out_shape=out_shape,
            grid_spec=pl.GridSpec(grid=grid,
                                  in_specs=[x_spec, pe_spec, m_spec],
                                  out_specs=out_spec),
            compiler_params=cparams,
        )(x2, pe_flat, mask)

    return out2.reshape(B, S, D)


# ----------------------------------------------------------------------------
# Embeddings module (lookup * sqrt(d_model)) — plain JAX glue.
# TODO(synk): fuse the embedding gather (scalar-prefetch token_ids + DMA gather
# of lut rows) into the PE kernel so x never round-trips HBM.
# ----------------------------------------------------------------------------
def embeddings(token_ids, lut, d_model):
    return lut[token_ids] * math.sqrt(d_model)


if __name__ == "__main__":
    # Small shapes consistent with the module: batch=2, seq=8, d_model=32.
    batch, seq, d_model, vocab, max_len = 2, 8, 32, 100, 60

    key = jax.random.PRNGKey(0)
    k_ids, k_lut = jax.random.split(key)

    token_ids = jax.random.randint(k_ids, (batch, seq), 0, vocab)
    lut = jax.random.normal(k_lut, (vocab, d_model), jnp.float32)

    # x = Embeddings(d_model, vocab)(token_ids)
    x = embeddings(token_ids, lut, d_model)                       # (B, S, D)
    pe_table = make_positional_table(max_len, d_model)            # (max_len, D)

    # p = 0 path — matches PositionalEncoding(d_model, 0): dropout is identity.
    out = jax.block_until_ready(positional_encoding(x, pe_table, seed=0, p=0.0))
    ref = x + pe_table[:seq][None, :, :]
    assert out.shape == (batch, seq, d_model)
    assert jnp.allclose(out, ref, atol=1e-6), "mismatch vs reference (p=0)"

    # p > 0 smoke test: every element must be either 0 or (x + pe) / (1 - p).
    p_drop = 0.1
    out_d = jax.block_until_ready(positional_encoding(x, pe_table, seed=123, p=p_drop))
    scaled = ref / (1.0 - p_drop)
    ok = jnp.isclose(out_d, 0.0, atol=1e-6) | jnp.isclose(out_d, scaled, rtol=1e-5, atol=1e-5)
    assert out_d.shape == (batch, seq, d_model)
    assert bool(jnp.all(ok)), "dropout output not in {0, scaled(x+pe)}"

    print("KERNEL_OK")
</pallas_src>

<mosaic_0001>
module attributes {stable_mosaic.version = 11 : i64} {
  func.func @_add_pe_kernel(%arg0: i32, %arg1: i32, %arg2: memref<2x256xf32, #tpu.memory_space<vmem>>, %arg3: memref<1x256xf32, #tpu.memory_space<vmem>>, %arg4: memref<2x256xf32, #tpu.memory_space<vmem>>) attributes {dimension_semantics = [#tpu.dimension_semantics<parallel>, #tpu.dimension_semantics<parallel>], iteration_bounds = array<i64: 1, 1>, scalar_prefetch = 0 : i64, scratch_operands = 0 : i64, tpu.core_type = #tpu.core_type<tc>, window_params = [{transform_indices = @transform_0, window_bounds = array<i64: 2, 256>}, {transform_indices = @transform_1, window_bounds = array<i64: 1, 256>}, {transform_indices = @transform_2, window_bounds = array<i64: 2, 256>}]} {
    %c0 = arith.constant 0 : index
    %c0_0 = arith.constant 0 : index
    %0 = vector.load %arg2[%c0, %c0_0] : memref<2x256xf32, #tpu.memory_space<vmem>>, vector<2x256xf32>
    %c0_1 = arith.constant 0 : index
    %c0_2 = arith.constant 0 : index
    %1 = vector.load %arg3[%c0_1, %c0_2] : memref<1x256xf32, #tpu.memory_space<vmem>>, vector<1x256xf32>
    %2 = vector.broadcast %1 : vector<1x256xf32> to vector<2x256xf32>
    %3 = arith.addf %0, %2 : vector<2x256xf32>
    %c0_3 = arith.constant 0 : index
    %c0_4 = arith.constant 0 : index
    %4 = vector.load %arg4[%c0_3, %c0_4] : memref<2x256xf32, #tpu.memory_space<vmem>>, vector<2x256xf32>
    tpu.vector_store %arg4[%c0_3, %c0_4], %3 {strides = array<i32>} : memref<2x256xf32, #tpu.memory_space<vmem>>, vector<2x256xf32>,
    return
  }
  func.func @transform_0(%arg0: i32, %arg1: i32) -> (i32, i32) {
    %c0_i32 = arith.constant 0 : i32
    return %arg0, %arg1 : i32, i32
  }
  func.func @transform_1(%arg0: i32, %arg1: i32) -> (i32, i32) {
    %c0_i32 = arith.constant 0 : i32
    %c0_i32_0 = arith.constant 0 : i32
    return %c0_i32, %arg1 : i32, i32
  }
  func.func @transform_2(%arg0: i32, %arg1: i32) -> (i32, i32) {
    %c0_i32 = arith.constant 0 : i32
    return %arg0, %arg1 : i32, i32
  }
}

</mosaic_0001>

<llo_original>
// kernel: positional_encoding.1
$region0: #{positional_encoding.1}
  #allocation0 [shape = 'u32[]', space=smem, size = 0x4, offset = 0x4, fixed_abs, tag = 'smem constant byte address 0x4 - core index']
  #allocation1 [shape = 'u32[144,128]{1,0:T(1,128)}', space=vmem, size = 0x12000, scoped, tag = 'internal scratch']
  %s0 = inlined_call_operand.vmem [shape: f32[2,256], index: 0, kind: input, shape index: {}]
  %s1 = inlined_call_operand.vmem [shape: f32[1,256], index: 1, kind: input, shape index: {}]
  %s2 = inlined_call_operand.vmem [shape: f32[2,256], index: 2, kind: output, shape index: {}]
  %s3 = sld [smem:[#allocation0]]
  $region18: #{positional_encoding.1} parent=0
    _
  %s5 = ssub.s32 1, %s3
  %s6 = scalar_select 0, %s5, %s3
  // Predicated region
  $region2: #{positional_encoding.1} parent=0 // pred_check
    _
  $region3: #{positional_encoding.1} parent=0 // pred_check_branch
    %8 = sbr.rel (0) target = $region5
  $region4: #{positional_encoding.1} parent=0 // pred_region
    _
  $region5: #{positional_encoding.1} parent=0 // pred_fallthru
    _
  // Predicated region
  $region6: #{positional_encoding.1} parent=0 // pred_check
    _
  $region7: #{positional_encoding.1} parent=0 // pred_check_branch
    %10 = sbr.rel (0) target = $region9
  $region8: #{positional_encoding.1} parent=0 // pred_region
    _
  $region9: #{positional_encoding.1} parent=0 // pred_fallthru
    _
  %v11 = vld [vmem:[%s0] sm:$0xf]
  %v12 = vld [vmem:[%s1] sm:$0x3]
  %v14 = vlaneseq
  %v15 = vshrl.u32 %v14, 7
  %v16 = vsub.s32 0, %v15
  %v17 = vrot.slane %v12, %v16
  %v18 = vlaneseq
  %v19 = vshrl.u32 %v18, 7
  %v20 = vsub.s32 1, %v19
  %v21 = vrot.slane %v12, %v20
  %v22 = vcombine.low %v17, %v21
  %v24 = vunpack.c.l.s4 1983009808
  %v25 = vunpack.c.0.s8 %v24
  %v26 = vlaneseq
  %v27 = vshrl.u32 %v26, 7
  %v28 = vsub.s32 %v25, %v27
  %v29 = vrot.slane %v22, %v28
  %v31 = vadd.f32 %v11, %v29
  %32 = vst [vmem:[%s2] sm:$0xf] %v31
  // Predicated region
  $region10: #{positional_encoding.1} parent=0 // pred_check
    _
  $region11: #{positional_encoding.1} parent=0 // pred_check_branch
    %34 = sbr.rel (0) target = $region13
  $region12: #{positional_encoding.1} parent=0 // pred_region
    _
  $region13: #{positional_encoding.1} parent=0 // pred_fallthru
    _
  // Predicated region
  $region14: #{positional_encoding.1} parent=0 // pred_check
    _
  $region15: #{positional_encoding.1} parent=0 // pred_check_branch
    %36 = sbr.rel (0) target = $region17
  $region16: #{positional_encoding.1} parent=0 // pred_region
    _
  $region17: #{positional_encoding.1} parent=0 // pred_fallthru
    _

</llo_original>
